<compile_context>
chip_gen: v7x
topology: tpu7x:2x2x1
jax: 0.10.0
libtpu: 0.0.40
codegen_flags: <defaults>
</compile_context>

<pallas_src>
import functools

import jax
import jax.numpy as jnp
from jax.experimental import pallas as pl
from jax.experimental.pallas import tpu as pltpu


def _round_up(x, m):
    return ((x + m - 1) // m) * m


def _default_bf16_epilogue():
    """bf16 VALU exists on v6e/v7x; keep the epilogue in f32 on v5e/v4."""
    try:
        kind = jax.devices()[0].device_kind.lower()
    except Exception:
        return False
    return ("v6" in kind) or ("v7" in kind)


def _critic_mlp_kernel(*refs, num_layers, bf16_epilogue):
    """Fused MLP forward.

    refs = (x_ref, w0, b0, w1, b1, ..., w_{L-1}, b_{L-1}, out_ref)
    Layers 0..L-2 are Linear+ReLU on the MXU (bf16 operands, f32 accumulation).
    The final Linear(., 1) is an f32 elementwise mul + lane reduce; out is [bt, 1].
    """
    x_ref = refs[0]
    out_ref = refs[-1]
    param_refs = refs[1:-1]

    # x arrives f32 and unpadded; cast to bf16 in-kernel (VPU) before the first dot.
    h = x_ref[...].astype(jnp.bfloat16)

    for layer in range(num_layers - 1):
        w = param_refs[2 * layer][...]          # bf16 [in, out]
        b = param_refs[2 * layer + 1][...]      # f32  [1, out]
        acc = jnp.dot(h, w, preferred_element_type=jnp.float32)   # MXU, f32 accum
        if bf16_epilogue:
            # v6e/v7x: bias-add + ReLU in bf16 -> halves VPU ops / vreg footprint.
            h = jnp.maximum(acc.astype(jnp.bfloat16) + b.astype(jnp.bfloat16), 0)
        else:
            # v5e/v4: no bf16 VALU -> keep the epilogue in f32, recast afterwards.
            h = jnp.maximum(acc + b, 0.0).astype(jnp.bfloat16)

    # Final layer: y = h @ w_last + b_last with w_last of shape [prev, 1].
    # Stored as a f32 row vector [1, prev]; compute as mul + lane reduce (no MXU pass
    # against a 127/128-zero tile, no padded output store).
    w_row = param_refs[2 * (num_layers - 1)][...]        # f32 [1, prev]
    b_last = param_refs[2 * (num_layers - 1) + 1][...]   # f32 [1, 1]
    val = jnp.sum(h.astype(jnp.float32) * w_row, axis=-1, keepdims=True) + b_last
    out_ref[...] = val.astype(out_ref.dtype)             # [bt, 1] store


def prepare_critic_params(params):
    """One-time prep (hoisted out of the forward): bf16 hidden weights, f32 biases,
    final layer as a f32 row vector.  params: list of (W [in,out] f32, b [out] f32)."""
    prepped = []
    num_layers = len(params)
    for i, (w, b) in enumerate(params):
        if i < num_layers - 1:
            prepped.append(jnp.asarray(w, jnp.bfloat16))                 # [in, out] bf16
            prepped.append(jnp.asarray(b, jnp.float32).reshape(1, -1))   # [1, out]  f32
        else:
            # [prev, 1] -> [1, prev] row vector, kept in f32 for the final reduce.
            prepped.append(jnp.asarray(w, jnp.float32).reshape(1, -1))
            prepped.append(jnp.asarray(b, jnp.float32).reshape(1, 1))
    return prepped


def critic_forward(x, prepped_params, *, batch_tile=None, bf16_epilogue=None,
                   single_buffer_weights=True):
    """Run the critic MLP with a single pallas_call.

    x:              [B, input_size] float32
    prepped_params: output of prepare_critic_params
    returns         [B, 1] float32
    """
    B, in_features = x.shape
    num_layers = len(prepped_params) // 2
    assert len(prepped_params) == 2 * num_layers and num_layers >= 1

    if bf16_epilogue is None:
        bf16_epilogue = _default_bf16_epilogue()

    # ---- batch tiling: single grid step for small B; 512-row tiles for large B. ----
    if batch_tile is None:
        if B <= 512:
            batch_tile = _round_up(B, 8)      # one grid step, no per-step overhead
        else:
            batch_tile = 512                  # multiple of 256 (MXU fill/drain amortized)
            # TODO(synk): on v7x (2 TCs) prefer an even number of equal grid steps so
            # both TensorCores finish together.
    batch_tile = max(8, _round_up(batch_tile, 8))
    B_pad = _round_up(B, batch_tile)
    x_in = x if B_pad == B else jnp.pad(x, ((0, B_pad - B), (0, 0)))
    grid = (B_pad // batch_tile,)

    # ---- real (unpadded) work for the scheduler hint. ----
    layer_dims = []
    prev = in_features
    for li in range(num_layers - 1):
        out_f = int(prepped_params[2 * li].shape[1])
        layer_dims.append((prev, out_f))
        prev = out_f
    layer_dims.append((prev, 1))
    flops = 2 * B * sum(i * o for i, o in layer_dims)
    param_bytes = sum(int(p.size) * p.dtype.itemsize for p in prepped_params)
    bytes_accessed = B * in_features * x.dtype.itemsize + param_bytes + B * 4
    cost = pl.CostEstimate(flops=flops, transcendentals=0, bytes_accessed=bytes_accessed)

    # ---- VMEM budget estimate (keep under the 64 MiB v7x budget). ----
    max_feat = max([in_features] + [o for _, o in layer_dims])
    x_tile_b = batch_tile * in_features * x_in.dtype.itemsize
    out_tile_b = batch_tile * 4
    act_b = batch_tile * max_feat * 4 * 4   # rough working-set headroom

    kernel = functools.partial(_critic_mlp_kernel, num_layers=num_layers,
                               bf16_epilogue=bf16_epilogue)

    def _run(single_buffer):
        in_specs = [pl.BlockSpec((batch_tile, in_features), lambda i: (i, 0))]
        for p in prepped_params:
            if single_buffer:
                # Constant index_map -> replicated block; single-buffer it (VMEM saver).
                spec = pl.BlockSpec(p.shape, lambda i: (0, 0),
                                    pipeline_mode=pl.Buffered(1))
            else:
                spec = pl.BlockSpec(p.shape, lambda i: (0, 0))
            in_specs.append(spec)
        out_spec = pl.BlockSpec((batch_tile, 1), lambda i: (i, 0))

        w_factor = 1 if single_buffer else 2
        vmem_est = 2 * (x_tile_b + out_tile_b) + w_factor * param_bytes + act_b
        vmem_limit = int(min(max(4 * vmem_est, 16 * 1024 * 1024), 48 * 1024 * 1024))

        call = pl.pallas_call(
            kernel,
            out_shape=jax.ShapeDtypeStruct((B_pad, 1), jnp.float32),
            grid=grid,
            in_specs=in_specs,
            out_specs=out_spec,
            compiler_params=pltpu.CompilerParams(
                dimension_semantics=("parallel",),
                vmem_limit_bytes=vmem_limit,
            ),
            cost_estimate=cost,
        )
        return call(x_in, *prepped_params)

    if single_buffer_weights and hasattr(pl, "Buffered"):
        try:
            y = _run(True)
        except Exception:
            # Fallback for jax versions without pipeline_mode / Buffered(1) support.
            y = _run(False)
    else:
        y = _run(False)

    return y[:B]


def init_critic_params(key, input_size, hidden_sizes):
    """Deterministic synthetic init matching nn.Linear shapes.

    PyTorch nn.Linear(in, out) has weight [out, in], bias [out]; we store the
    transpose W: [in, out] (math-equivalent) and bias [out], all f32.
    """
    # TODO(synk): layer_init_filter is not defined in the spec; scaled-normal stand-in.
    sizes = [input_size] + list(hidden_sizes) + [1]
    params = []
    for i in range(len(sizes) - 1):
        fan_in, fan_out = sizes[i], sizes[i + 1]
        key, wk, bk = jax.random.split(key, 3)
        w = jax.random.normal(wk, (fan_in, fan_out), dtype=jnp.float32)
        w = w * (1.0 / jnp.sqrt(jnp.float32(fan_in)))
        b = 0.01 * jax.random.normal(bk, (fan_out,), dtype=jnp.float32)
        params.append((w, b))
    return params


def critic_forward_ref_f32(x, params):
    """Full-f32 reference (the original PyTorch math)."""
    h = x.astype(jnp.float32)
    for i, (w, b) in enumerate(params):
        h = h @ w + b.reshape(1, -1)
        if i < len(params) - 1:
            h = jnp.maximum(h, 0.0)
    return h


def critic_forward_ref_matched(x, params, *, bf16_epilogue):
    """Plain-JAX reference matching the kernel's numeric path."""
    h = x.astype(jnp.bfloat16)
    for w, b in params[:-1]:
        acc = jnp.dot(h, w.astype(jnp.bfloat16), preferred_element_type=jnp.float32)
        b2 = b.reshape(1, -1)
        if bf16_epilogue:
            h = jnp.maximum(acc.astype(jnp.bfloat16) + b2.astype(jnp.bfloat16), 0)
        else:
            h = jnp.maximum(acc + b2, 0.0).astype(jnp.bfloat16)
    w_last, b_last = params[-1]
    val = jnp.sum(h.astype(jnp.float32) * w_last.reshape(1, -1), axis=-1, keepdims=True)
    return val + b_last.reshape(1, 1)


if __name__ == "__main__":
    key = jax.random.PRNGKey(0)

    batch = 16
    input_size = 32
    hidden_sizes = [64, 64]

    key, xk, pk = jax.random.split(key, 3)
    x = jax.random.normal(xk, (batch, input_size), dtype=jnp.float32)
    params = init_critic_params(pk, input_size, hidden_sizes)
    prepped = prepare_critic_params(params)   # one-time weight prep (hoisted)

    bf16_epi = _default_bf16_epilogue()
    out = critic_forward(x, prepped, bf16_epilogue=bf16_epi)
    out = jax.block_until_ready(out)
    assert out.shape == (batch, 1), out.shape

    ref_matched = critic_forward_ref_matched(x, params, bf16_epilogue=bf16_epi)
    ref_f32 = critic_forward_ref_f32(x, params)

    err_matched = jnp.max(jnp.abs(out - ref_matched))
    err_f32 = jnp.max(jnp.abs(out - ref_f32))
    assert jnp.allclose(out, ref_matched, atol=5e-3, rtol=5e-3), (
        f"max abs err vs matched ref {err_matched}")
    assert jnp.allclose(out, ref_f32, atol=5e-2, rtol=5e-2), (
        f"max abs err vs f32 ref {err_f32}")

    print("KERNEL_OK")
</pallas_src>

<mosaic_0001>
module attributes {stable_mosaic.version = 11 : i64} {
  func.func @_critic_mlp_kernel(%arg0: i32, %arg1: memref<16x32xf32, #tpu.memory_space<vmem>>, %arg2: memref<32x64xbf16, #tpu.memory_space<vmem>>, %arg3: memref<1x64xf32, #tpu.memory_space<vmem>>, %arg4: memref<64x64xbf16, #tpu.memory_space<vmem>>, %arg5: memref<1x64xf32, #tpu.memory_space<vmem>>, %arg6: memref<1x64xf32, #tpu.memory_space<vmem>>, %arg7: memref<1x1xf32, #tpu.memory_space<vmem>>, %arg8: memref<16x1xf32, #tpu.memory_space<vmem>>) attributes {dimension_semantics = [#tpu.dimension_semantics<parallel>], iteration_bounds = array<i64: 1>, scalar_prefetch = 0 : i64, scratch_operands = 0 : i64, tpu.core_type = #tpu.core_type<tc>, window_params = [{transform_indices = @transform_0, window_bounds = array<i64: 16, 32>}, {pipeline_mode = #tpu.pipeline_mode<synchronous>, transform_indices = @transform_1, window_bounds = array<i64: 32, 64>}, {pipeline_mode = #tpu.pipeline_mode<synchronous>, transform_indices = @transform_2, window_bounds = array<i64: 1, 64>}, {pipeline_mode = #tpu.pipeline_mode<synchronous>, transform_indices = @transform_3, window_bounds = array<i64: 64, 64>}, {pipeline_mode = #tpu.pipeline_mode<synchronous>, transform_indices = @transform_4, window_bounds = array<i64: 1, 64>}, {pipeline_mode = #tpu.pipeline_mode<synchronous>, transform_indices = @transform_5, window_bounds = array<i64: 1, 64>}, {pipeline_mode = #tpu.pipeline_mode<synchronous>, transform_indices = @transform_6, window_bounds = array<i64: 1, 1>}, {transform_indices = @transform_7, window_bounds = array<i64: 16, 1>}]} {
    %c0 = arith.constant 0 : index
    %c0_0 = arith.constant 0 : index
    %0 = vector.load %arg1[%c0, %c0_0] : memref<16x32xf32, #tpu.memory_space<vmem>>, vector<16x32xf32>
    %1 = arith.truncf %0 : vector<16x32xf32> to vector<16x32xbf16>
    %c0_1 = arith.constant 0 : index
    %c0_2 = arith.constant 0 : index
    %2 = vector.load %arg2[%c0_1, %c0_2] : memref<32x64xbf16, #tpu.memory_space<vmem>>, vector<32x64xbf16>
    %c0_3 = arith.constant 0 : index
    %c0_4 = arith.constant 0 : index
    %3 = vector.load %arg3[%c0_3, %c0_4] : memref<1x64xf32, #tpu.memory_space<vmem>>, vector<1x64xf32>
    %cst = arith.constant dense<0.000000e+00> : vector<16x64xf32>
    %4 = tpu.matmul %1, %2, %cst {dimension_numbers = #tpu.dot_dimension_numbers<[1], [0], [0], [1], [0, 0, 1, 1], [], []>} : vector<16x32xbf16>, vector<32x64xbf16>, vector<16x64xf32> -> vector<16x64xf32>
    %5 = vector.broadcast %3 : vector<1x64xf32> to vector<16x64xf32>
    %6 = arith.addf %4, %5 : vector<16x64xf32>
    %cst_5 = arith.constant 0.000000e+00 : f32
    %7 = vector.broadcast %cst_5 : f32 to vector<16x64xf32>
    %8 = arith.maximumf %6, %7 : vector<16x64xf32>
    %9 = arith.truncf %8 : vector<16x64xf32> to vector<16x64xbf16>
    %c0_6 = arith.constant 0 : index
    %c0_7 = arith.constant 0 : index
    %10 = vector.load %arg4[%c0_6, %c0_7] : memref<64x64xbf16, #tpu.memory_space<vmem>>, vector<64x64xbf16>
    %c0_8 = arith.constant 0 : index
    %c0_9 = arith.constant 0 : index
    %11 = vector.load %arg5[%c0_8, %c0_9] : memref<1x64xf32, #tpu.memory_space<vmem>>, vector<1x64xf32>
    %cst_10 = arith.constant dense<0.000000e+00> : vector<16x64xf32>
    %12 = tpu.matmul %9, %10, %cst_10 {dimension_numbers = #tpu.dot_dimension_numbers<[1], [0], [0], [1], [0, 0, 1, 1], [], []>} : vector<16x64xbf16>, vector<64x64xbf16>, vector<16x64xf32> -> vector<16x64xf32>
    %13 = vector.broadcast %11 : vector<1x64xf32> to vector<16x64xf32>
    %14 = arith.addf %12, %13 : vector<16x64xf32>
    %cst_11 = arith.constant 0.000000e+00 : f32
    %15 = vector.broadcast %cst_11 : f32 to vector<16x64xf32>
    %16 = arith.maximumf %14, %15 : vector<16x64xf32>
    %17 = arith.truncf %16 : vector<16x64xf32> to vector<16x64xbf16>
    %c0_12 = arith.constant 0 : index
    %c0_13 = arith.constant 0 : index
    %18 = vector.load %arg6[%c0_12, %c0_13] : memref<1x64xf32, #tpu.memory_space<vmem>>, vector<1x64xf32>
    %c0_14 = arith.constant 0 : index
    %c0_15 = arith.constant 0 : index
    %19 = vector.load %arg7[%c0_14, %c0_15] : memref<1x1xf32, #tpu.memory_space<vmem>>, vector<1x1xf32>
    %20 = arith.extf %17 : vector<16x64xbf16> to vector<16x64xf32>
    %21 = vector.broadcast %18 : vector<1x64xf32> to vector<16x64xf32>
    %22 = arith.mulf %20, %21 : vector<16x64xf32>
    %cst_16 = arith.constant dense<0.000000e+00> : vector<16xf32>
    %23 = vector.multi_reduction <add>, %22, %cst_16 [1] : vector<16x64xf32> to vector<16xf32>
    %24 = vector.shape_cast %23 : vector<16xf32> to vector<16x1xf32>
    %25 = vector.broadcast %19 : vector<1x1xf32> to vector<16x1xf32>
    %26 = arith.addf %24, %25 : vector<16x1xf32>
    %c0_17 = arith.constant 0 : index
    %c0_18 = arith.constant 0 : index
    %27 = vector.load %arg8[%c0_17, %c0_18] : memref<16x1xf32, #tpu.memory_space<vmem>>, vector<16x1xf32>
    tpu.vector_store %arg8[%c0_17, %c0_18], %26 {strides = array<i32>} : memref<16x1xf32, #tpu.memory_space<vmem>>, vector<16x1xf32>,
    return
  }
  func.func @transform_0(%arg0: i32) -> (i32, i32) {
    %c0_i32 = arith.constant 0 : i32
    %c0_i32_0 = arith.constant 0 : i32
    return %arg0, %c0_i32 : i32, i32
  }
  func.func @transform_1(%arg0: i32) -> (i32, i32) {
    %c0_i32 = arith.constant 0 : i32
    %c0_i32_0 = arith.constant 0 : i32
    %c0_i32_1 = arith.constant 0 : i32
    return %c0_i32, %c0_i32_0 : i32, i32
  }
  func.func @transform_2(%arg0: i32) -> (i32, i32) {
    %c0_i32 = arith.constant 0 : i32
    %c0_i32_0 = arith.constant 0 : i32
    %c0_i32_1 = arith.constant 0 : i32
    return %c0_i32, %c0_i32_0 : i32, i32
  }
  func.func @transform_3(%arg0: i32) -> (i32, i32) {
    %c0_i32 = arith.constant 0 : i32
    %c0_i32_0 = arith.constant 0 : i32
    %c0_i32_1 = arith.constant 0 : i32
    return %c0_i32, %c0_i32_0 : i32, i32
  }
  func.func @transform_4(%arg0: i32) -> (i32, i32) {
    %c0_i32 = arith.constant 0 : i32
    %c0_i32_0 = arith.constant 0 : i32
    %c0_i32_1 = arith.constant 0 : i32
    return %c0_i32, %c0_i32_0 : i32, i32
  }
  func.func @transform_5(%arg0: i32) -> (i32, i32) {
    %c0_i32 = arith.constant 0 : i32
    %c0_i32_0 = arith.constant 0 : i32
    %c0_i32_1 = arith.constant 0 : i32
    return %c0_i32, %c0_i32_0 : i32, i32
  }
  func.func @transform_6(%arg0: i32) -> (i32, i32) {
    %c0_i32 = arith.constant 0 : i32
    %c0_i32_0 = arith.constant 0 : i32
    %c0_i32_1 = arith.constant 0 : i32
    return %c0_i32, %c0_i32_0 : i32, i32
  }
  func.func @transform_7(%arg0: i32) -> (i32, i32) {
    %c0_i32 = arith.constant 0 : i32
    %c0_i32_0 = arith.constant 0 : i32
    return %arg0, %c0_i32 : i32, i32
  }
}

module attributes {stable_mosaic.version = 11 : i64} {
  func.func @_critic_mlp_kernel(%arg0: i32, %arg1: memref<16x32xf32, #tpu.memory_space<vmem>>, %arg2: memref<32x64xbf16, #tpu.memory_space<vmem>>, %arg3: memref<1x64xf32, #tpu.memory_space<vmem>>, %arg4: memref<64x64xbf16, #tpu.memory_space<vmem>>, %arg5: memref<1x64xf32, #tpu.memory_space<vmem>>, %arg6: memref<1x64xf32, #tpu.memory_space<vmem>>, %arg7: memref<1x1xf32, #tpu.memory_space<vmem>>, %arg8: memref<16x1xf32, #tpu.memory_space<vmem>>) attributes {dimension_semantics = [#tpu.dimension_semantics<parallel>], iteration_bounds = array<i64: 1>, scalar_prefetch = 0 : i64, scratch_operands = 0 : i64, tpu.core_type = #tpu.core_type<tc>, window_params = [{transform_indices = @transform_0, window_bounds = array<i64: 16, 32>}, {pipeline_mode = #tpu.pipeline_mode<synchronous>, transform_indices = @transform_1, window_bounds = array<i64: 32, 64>}, {pipeline_mode = #tpu.pipeline_mode<synchronous>, transform_indices = @transform_2, window_bounds = array<i64: 1, 64>}, {pipeline_mode = #tpu.pipeline_mode<synchronous>, transform_indices = @transform_3, window_bounds = array<i64: 64, 64>}, {pipeline_mode = #tpu.pipeline_mode<synchronous>, transform_indices = @transform_4, window_bounds = array<i64: 1, 64>}, {pipeline_mode = #tpu.pipeline_mode<synchronous>, transform_indices = @transform_5, window_bounds = array<i64: 1, 64>}, {pipeline_mode = #tpu.pipeline_mode<synchronous>, transform_indices = @transform_6, window_bounds = array<i64: 1, 1>}, {transform_indices = @transform_7, window_bounds = array<i64: 16, 1>}]} {
    %c0 = arith.constant 0 : index
    %c0_0 = arith.constant 0 : index
    %0 = vector.load %arg1[%c0, %c0_0] : memref<16x32xf32, #tpu.memory_space<vmem>>, vector<16x32xf32>
    %1 = arith.truncf %0 : vector<16x32xf32> to vector<16x32xbf16>
    %c0_1 = arith.constant 0 : index
    %c0_2 = arith.constant 0 : index
    %2 = vector.load %arg2[%c0_1, %c0_2] : memref<32x64xbf16, #tpu.memory_space<vmem>>, vector<32x64xbf16>
    %c0_3 = arith.constant 0 : index
    %c0_4 = arith.constant 0 : index
    %3 = vector.load %arg3[%c0_3, %c0_4] : memref<1x64xf32, #tpu.memory_space<vmem>>, vector<1x64xf32>
    %cst = arith.constant dense<0.000000e+00> : vector<16x64xf32>
    %4 = tpu.matmul %1, %2, %cst {dimension_numbers = #tpu.dot_dimension_numbers<[1], [0], [0], [1], [0, 0, 1, 1], [], []>} : vector<16x32xbf16>, vector<32x64xbf16>, vector<16x64xf32> -> vector<16x64xf32>
    %5 = vector.broadcast %3 : vector<1x64xf32> to vector<16x64xf32>
    %6 = arith.addf %4, %5 : vector<16x64xf32>
    %cst_5 = arith.constant 0.000000e+00 : f32
    %7 = vector.broadcast %cst_5 : f32 to vector<16x64xf32>
    %8 = arith.maximumf %6, %7 : vector<16x64xf32>
    %9 = arith.truncf %8 : vector<16x64xf32> to vector<16x64xbf16>
    %c0_6 = arith.constant 0 : index
    %c0_7 = arith.constant 0 : index
    %10 = vector.load %arg4[%c0_6, %c0_7] : memref<64x64xbf16, #tpu.memory_space<vmem>>, vector<64x64xbf16>
    %c0_8 = arith.constant 0 : index
    %c0_9 = arith.constant 0 : index
    %11 = vector.load %arg5[%c0_8, %c0_9] : memref<1x64xf32, #tpu.memory_space<vmem>>, vector<1x64xf32>
    %cst_10 = arith.constant dense<0.000000e+00> : vector<16x64xf32>
    %12 = tpu.matmul %9, %10, %cst_10 {dimension_numbers = #tpu.dot_dimension_numbers<[1], [0], [0], [1], [0, 0, 1, 1], [], []>} : vector<16x64xbf16>, vector<64x64xbf16>, vector<16x64xf32> -> vector<16x64xf32>
    %13 = vector.broadcast %11 : vector<1x64xf32> to vector<16x64xf32>
    %14 = arith.addf %12, %13 : vector<16x64xf32>
    %cst_11 = arith.constant 0.000000e+00 : f32
    %15 = vector.broadcast %cst_11 : f32 to vector<16x64xf32>
    %16 = arith.maximumf %14, %15 : vector<16x64xf32>
    %17 = arith.truncf %16 : vector<16x64xf32> to vector<16x64xbf16>
    %c0_12 = arith.constant 0 : index
    %c0_13 = arith.constant 0 : index
    %18 = vector.load %arg6[%c0_12, %c0_13] : memref<1x64xf32, #tpu.memory_space<vmem>>, vector<1x64xf32>
    %c0_14 = arith.constant 0 : index
    %c0_15 = arith.constant 0 : index
    %19 = vector.load %arg7[%c0_14, %c0_15] : memref<1x1xf32, #tpu.memory_space<vmem>>, vector<1x1xf32>
    %20 = arith.extf %17 : vector<16x64xbf16> to vector<16x64xf32>
    %21 = vector.broadcast %18 : vector<1x64xf32> to vector<16x64xf32>
    %22 = arith.mulf %20, %21 : vector<16x64xf32>
    %cst_16 = arith.constant dense<0.000000e+00> : vector<16xf32>
    %23 = vector.multi_reduction <add>, %22, %cst_16 [1] : vector<16x64xf32> to vector<16xf32>
    %24 = vector.shape_cast %23 : vector<16xf32> to vector<16x1xf32>
    %25 = vector.broadcast %19 : vector<1x1xf32> to vector<16x1xf32>
    %26 = arith.addf %24, %25 : vector<16x1xf32>
    %c0_17 = arith.constant 0 : index
    %c0_18 = arith.constant 0 : index
    %27 = vector.load %arg8[%c0_17, %c0_18] : memref<16x1xf32, #tpu.memory_space<vmem>>, vector<16x1xf32>
    tpu.vector_store %arg8[%c0_17, %c0_18], %26 {strides = array<i32>} : memref<16x1xf32, #tpu.memory_space<vmem>>, vector<16x1xf32>,
    return
  }
  func.func @transform_0(%arg0: i32) -> (i32, i32) {
    %c0_i32 = arith.constant 0 : i32
    %c0_i32_0 = arith.constant 0 : i32
    return %arg0, %c0_i32 : i32, i32
  }
  func.func @transform_1(%arg0: i32) -> (i32, i32) {
    %c0_i32 = arith.constant 0 : i32
    %c0_i32_0 = arith.constant 0 : i32
    %c0_i32_1 = arith.constant 0 : i32
    return %c0_i32, %c0_i32_0 : i32, i32
  }
  func.func @transform_2(%arg0: i32) -> (i32, i32) {
    %c0_i32 = arith.constant 0 : i32
    %c0_i32_0 = arith.constant 0 : i32
    %c0_i32_1 = arith.constant 0 : i32
    return %c0_i32, %c0_i32_0 : i32, i32
  }
  func.func @transform_3(%arg0: i32) -> (i32, i32) {
    %c0_i32 = arith.constant 0 : i32
    %c0_i32_0 = arith.constant 0 : i32
    %c0_i32_1 = arith.constant 0 : i32
    return %c0_i32, %c0_i32_0 : i32, i32
  }
  func.func @transform_4(%arg0: i32) -> (i32, i32) {
    %c0_i32 = arith.constant 0 : i32
    %c0_i32_0 = arith.constant 0 : i32
    %c0_i32_1 = arith.constant 0 : i32
    return %c0_i32, %c0_i32_0 : i32, i32
  }
  func.func @transform_5(%arg0: i32) -> (i32, i32) {
    %c0_i32 = arith.constant 0 : i32
    %c0_i32_0 = arith.constant 0 : i32
    %c0_i32_1 = arith.constant 0 : i32
    return %c0_i32, %c0_i32_0 : i32, i32
  }
  func.func @transform_6(%arg0: i32) -> (i32, i32) {
    %c0_i32 = arith.constant 0 : i32
    %c0_i32_0 = arith.constant 0 : i32
    %c0_i32_1 = arith.constant 0 : i32
    return %c0_i32, %c0_i32_0 : i32, i32
  }
  func.func @transform_7(%arg0: i32) -> (i32, i32) {
    %c0_i32 = arith.constant 0 : i32
    %c0_i32_0 = arith.constant 0 : i32
    return %arg0, %c0_i32 : i32, i32
  }
}

</mosaic_0001>

<llo_original>
// kernel: tpu_custom_call.1
$region0: #{tpu_custom_call.1}
  #allocation0 [shape = 'u32[]', space=smem, size = 0x4, offset = 0x4, fixed_abs, tag = 'smem constant byte address 0x4 - core index']
  #allocation1 [shape = 'u32[144,128]{1,0:T(1,128)}', space=vmem, size = 0x12000, scoped, tag = 'internal scratch']
  #allocation2 [shape = 'f32[1,1]{1,0:T(1,128)S(1)}', space=vmem, size = 0x200, scoped, tag = 'scoped memory for tpu_custom_call.1']
  %s0 = inlined_call_operand.hbm [shape: f32[16,32], index: 0, kind: input, shape index: {}]
  %s1 = inlined_call_operand.hbm [shape: bf16[32,64], index: 1, kind: input, shape index: {}]
  %s2 = inlined_call_operand.vmem [shape: f32[1,64], index: 2, kind: input, shape index: {}]
  %s3 = inlined_call_operand.hbm [shape: bf16[64,64], index: 3, kind: input, shape index: {}]
  %s4 = inlined_call_operand.vmem [shape: f32[1,64], index: 4, kind: input, shape index: {}]
  %s5 = inlined_call_operand.vmem [shape: f32[1,64], index: 5, kind: input, shape index: {}]
  %s6 = inlined_call_operand.<no memory space> [shape: f32[1,1], index: 6, kind: input, shape index: {}]
  %s7 = inlined_call_operand.vmem [shape: f32[16,1], index: 7, kind: output, shape index: {}]
  %s8 = sld [smem:[#allocation0]]
  $region50: #{tpu_custom_call.1} parent=0
    _
  %s10 = ssub.s32 1, %s8
  %s11 = scalar_select 0, %s10, %s8
  %v12 = vstv %s6
  %13 = vst [vmem:[#allocation2] sm:$0x1] %v12
  $region1: #{tpu_custom_call.1} parent=0
    #allocation3 [shape = 'u8[8192]{0}', space=vmem, size = 0x2000, scoped, tag = 'input window, operand 0, single buffered']
    #allocation4 [shape = 's32[1]{0}', space=sflag, size = 0x4, scoped, tag = 'scoped memory for tpu_custom_call.1']
    #allocation5 [shape = 'u8[8192]{0}', space=vmem, size = 0x2000, scoped, tag = 'input window, operand 1, single buffered']
    #allocation6 [shape = 's32[1]{0}', space=sflag, size = 0x4, scoped, tag = 'scoped memory for tpu_custom_call.1']
    #allocation7 [shape = 'u8[16384]{0}', space=vmem, size = 0x4000, scoped, tag = 'input window, operand 3, single buffered']
    %14 = vsyncpa [#allocation4], 0
    %15 = vsyncpa [#allocation6], 0
    // Predicated region
    $region2: #{tpu_custom_call.1} parent=1 // pred_check
      _
    $region3: #{tpu_custom_call.1} parent=1 // pred_check_branch
      %17 = sbr.rel (0) target = $region5
    $region4: #{tpu_custom_call.1} parent=1 // pred_region
      %s19 = ssub.s32 256, 256
      %20 = vsyncadd [#allocation4], %s19
      %s21 = sshll.u32 [#allocation3], 4
      %s22 = int_to_ptr.vmem [resolvable:$true] %s21
      %27 = dma.hbm_to_vmem [thread:$0]  %s0, 256, %s22, [#allocation4], 128, 128, 8
    $region5: #{tpu_custom_call.1} parent=1 // pred_fallthru
      _
    // Predicated region
    $region6: #{tpu_custom_call.1} parent=1 // pred_check
      _
    $region7: #{tpu_custom_call.1} parent=1 // pred_check_branch
      %29 = sbr.rel (0) target = $region9
    $region8: #{tpu_custom_call.1} parent=1 // pred_region
      %s31 = ssub.s32 256, 256
      %32 = vsyncadd [#allocation6], %s31
      %s33 = sshll.u32 [#allocation5], 4
      %s34 = int_to_ptr.vmem [resolvable:$true] %s33
      %39 = dma.hbm_to_vmem [thread:$0]  %s1, 256, %s34, [#allocation6], 64, 64, 4
    $region9: #{tpu_custom_call.1} parent=1 // pred_fallthru
      _
    // Predicated region
    $region10: #{tpu_custom_call.1} parent=1 // pred_check
      _
    $region11: #{tpu_custom_call.1} parent=1 // pred_check_branch
      %41 = sbr.rel (0) target = $region13
    $region12: #{tpu_custom_call.1} parent=1 // pred_region
      _
    $region13: #{tpu_custom_call.1} parent=1 // pred_fallthru
      _
    // Predicated region
    $region14: #{tpu_custom_call.1} parent=1 // pred_check
      _
    $region15: #{tpu_custom_call.1} parent=1 // pred_check_branch
      %43 = sbr.rel (0) target = $region17
    $region16: #{tpu_custom_call.1} parent=1 // pred_region
      %s45 = ssub.s32 512, 512
      %46 = vsyncadd [#allocation6], %s45
      %s47 = sshll.u32 [#allocation7], 4
      %s48 = int_to_ptr.vmem [resolvable:$true] %s47
      %53 = dma.hbm_to_vmem [thread:$0]  %s3, 512, %s48, [#allocation6], 64, 64, 4
    $region17: #{tpu_custom_call.1} parent=1 // pred_fallthru
      _
    // Predicated region
    $region18: #{tpu_custom_call.1} parent=1 // pred_check
      _
    $region19: #{tpu_custom_call.1} parent=1 // pred_check_branch
      %55 = sbr.rel (0) target = $region21
    $region20: #{tpu_custom_call.1} parent=1 // pred_region
      _
    $region21: #{tpu_custom_call.1} parent=1 // pred_fallthru
      _
    // Predicated region
    $region22: #{tpu_custom_call.1} parent=1 // pred_check
      _
    $region23: #{tpu_custom_call.1} parent=1 // pred_check_branch
      %57 = sbr.rel (0) target = $region25
    $region24: #{tpu_custom_call.1} parent=1 // pred_region
      _
    $region25: #{tpu_custom_call.1} parent=1 // pred_fallthru
      _
    // Predicated region
    $region26: #{tpu_custom_call.1} parent=1 // pred_check
      _
    $region27: #{tpu_custom_call.1} parent=1 // pred_check_branch
      %59 = sbr.rel (0) target = $region29
    $region28: #{tpu_custom_call.1} parent=1 // pred_region
      _
    $region29: #{tpu_custom_call.1} parent=1 // pred_fallthru
      _
    // Predicated region
    $region30: #{tpu_custom_call.1} parent=1 // pred_check
      _
    $region31: #{tpu_custom_call.1} parent=1 // pred_check_branch
      %61 = sbr.rel (0) target = $region33
    $region32: #{tpu_custom_call.1} parent=1 // pred_region
      %62 = dma.done [#allocation4], 256
    $region33: #{tpu_custom_call.1} parent=1 // pred_fallthru
      _
    // Predicated region
    $region34: #{tpu_custom_call.1} parent=1 // pred_check
      _
    $region35: #{tpu_custom_call.1} parent=1 // pred_check_branch
      %64 = sbr.rel (0) target = $region37
    $region36: #{tpu_custom_call.1} parent=1 // pred_region
      %65 = dma.done [#allocation6], 256
    $region37: #{tpu_custom_call.1} parent=1 // pred_fallthru
      _
    // Predicated region
    $region38: #{tpu_custom_call.1} parent=1 // pred_check
      _
    $region39: #{tpu_custom_call.1} parent=1 // pred_check_branch
      %67 = sbr.rel (0) target = $region41
    $region40: #{tpu_custom_call.1} parent=1 // pred_region
      %68 = dma.done [#allocation6], 512
    $region41: #{tpu_custom_call.1} parent=1 // pred_fallthru
      _
    %v70 = vld [vmem:[#allocation3] sm:$0xff]
    %v71 = vld [vmem:[#allocation3 + $0x8] sm:$0xff]
    %v72 = vpack.c.bf16 %v71, %v70
    %v73 = vld [vmem:[#allocation5] sm:$0xf]
    %v74 = vld [vmem:[#allocation5 + $0x4] sm:$0xf]
    %v75 = vld [vmem:[#allocation5 + $0x8] sm:$0xf]
    %v76 = vld [vmem:[#allocation5 + $0xc] sm:$0xf]
    %v77 = vld [vmem:[%s2] sm:$0x1]
    %v79 = vlaneseq
    %v80 = vshrl.u32 %v79, 7
    %v81 = vsub.s32 0, %v80
    %v82 = vrot.slane %v77, %v81
    %v88 = vunpack.c.l.b16 %v73
    %v89 = vunpack.c.l.b16 %v74
    %v90 = vunpack.c.l.b16 %v75
    %v91 = vunpack.c.l.b16 %v76
    %v92 = vpack.c.b16 %v89, %v88
    %v93 = vpack.c.b16 %v91, %v90
    %vm96 = vcmask 261120
    %v98 = vsel %vm96, %v72, 0
    %100 = vmatprep.subr.bf16.mxu0 0
    %101 = vmatpush1.bf16.msra.mxu0 %v92
    %102 = vmatprep.subr.bf16.mxu0 0
    %103 = vmatpush1.bf16.msra.mxu0 %v93
    %104 = vmatprep.subr.bf16.mxu0 0
    %105 = vmatpush1.bf16.msra.mxu0 0
    %106 = vmatprep.subr.bf16.mxu0 0
    %107 = vmatpush1.bf16.msra.mxu0 0
    %108 = vmatprep.subr.bf16.mxu0 0
    %109 = vmatpush1.bf16.msra.mxu0 0
    %110 = vmatprep.subr.bf16.mxu0 0
    %111 = vmatpush1.bf16.msra.mxu0 0
    %112 = vmatprep.subr.bf16.mxu0 0
    %113 = vmatpush1.bf16.msra.mxu0 0
    %114 = vmatprep.subr.bf16.mxu0 0
    %115 = vmatpush1.bf16.msra.mxu0 0
    %116 = vmatprep.subr.bf16.mxu0 0
    %117 = vmatpush1.bf16.msra.mxu0 0
    %118 = vmatprep.subr.bf16.mxu0 0
    %119 = vmatpush1.bf16.msra.mxu0 0
    %120 = vmatprep.subr.bf16.mxu0 0
    %121 = vmatpush1.bf16.msra.mxu0 0
    %122 = vmatprep.subr.bf16.mxu0 0
    %123 = vmatpush1.bf16.msra.mxu0 0
    %124 = vmatprep.subr.bf16.mxu0 0
    %125 = vmatpush1.bf16.msra.mxu0 0
    %126 = vmatprep.subr.bf16.mxu0 0
    %127 = vmatpush1.bf16.msra.mxu0 0
    %128 = vmatprep.subr.bf16.mxu0 0
    %129 = vmatpush1.bf16.msra.mxu0 0
    %130 = vmatprep.subr.bf16.mxu0 0
    %131 = vmatpush1.bf16.msra.mxu0 0
    %132 = vmatprep.mubr.bf16.mxu0 0
    %133 = vmatmul.mubr.bf16.gmra.mrb[0].mxu0 %v98
    %v134 = vpop.f32.mrb[0].mxu0
    %v135 = vadd.f32 %v82, %v134
    %v136 = vpop.f32.mrb[0].mxu0
    %v137 = vpop.f32.mrb[0].mxu0
    %v138 = vadd.f32 %v82, %v137
    %v139 = vpop.f32.mrb[0].mxu0
    %140 = vdwg.mxu0
    %v141 = vmax.f32 %v135, 0.0
    %v142 = vmax.f32 %v138, 0.0
    %v143 = vpack.c.bf16 %v142, %v141
    %v144 = vld [vmem:[#allocation7] sm:$0xf]
    %v145 = vld [vmem:[#allocation7 + $0x4] sm:$0xf]
    %v146 = vld [vmem:[#allocation7 + $0x8] sm:$0xf]
    %v147 = vld [vmem:[#allocation7 + $0xc] sm:$0xf]
    %v148 = vld [vmem:[#allocation7 + $0x10] sm:$0xf]
    %v149 = vld [vmem:[#allocation7 + $0x14] sm:$0xf]
    %v150 = vld [vmem:[#allocation7 + $0x18] sm:$0xf]
    %v151 = vld [vmem:[#allocation7 + $0x1c] sm:$0xf]
    %v152 = vld [vmem:[%s4] sm:$0x1]
    %v154 = vlaneseq
    %v155 = vshrl.u32 %v154, 7
    %v156 = vsub.s32 0, %v155
    %v157 = vrot.slane %v152, %v156
    %v167 = vunpack.c.l.b16 %v144
    %v168 = vunpack.c.l.b16 %v145
    %v169 = vunpack.c.l.b16 %v146
    %v170 = vunpack.c.l.b16 %v147
    %v171 = vunpack.c.l.b16 %v148
    %v172 = vunpack.c.l.b16 %v149
    %v173 = vunpack.c.l.b16 %v150
    %v174 = vunpack.c.l.b16 %v151
    %v175 = vpack.c.b16 %v168, %v167
    %v176 = vpack.c.b16 %v170, %v169
    %v177 = vpack.c.b16 %v172, %v171
    %v178 = vpack.c.b16 %v174, %v173
    %vm183 = vcmask 523264
    %v185 = vsel %vm183, %v143, 0
    %187 = vmatprep.subr.bf16.mxu0 0
    %188 = vmatpush1.bf16.msra.mxu0 %v175
    %189 = vmatprep.subr.bf16.mxu0 0
    %190 = vmatpush1.bf16.msra.mxu0 %v176
    %191 = vmatprep.subr.bf16.mxu0 0
    %192 = vmatpush1.bf16.msra.mxu0 %v177
    %193 = vmatprep.subr.bf16.mxu0 0
    %194 = vmatpush1.bf16.msra.mxu0 %v178
    %195 = vmatprep.subr.bf16.mxu0 0
    %196 = vmatpush1.bf16.msra.mxu0 0
    %197 = vmatprep.subr.bf16.mxu0 0
    %198 = vmatpush1.bf16.msra.mxu0 0
    %199 = vmatprep.subr.bf16.mxu0 0
    %200 = vmatpush1.bf16.msra.mxu0 0
    %201 = vmatprep.subr.bf16.mxu0 0
    %202 = vmatpush1.bf16.msra.mxu0 0
    %203 = vmatprep.subr.bf16.mxu0 0
    %204 = vmatpush1.bf16.msra.mxu0 0
    %205 = vmatprep.subr.bf16.mxu0 0
    %206 = vmatpush1.bf16.msra.mxu0 0
    %207 = vmatprep.subr.bf16.mxu0 0
    %208 = vmatpush1.bf16.msra.mxu0 0
    %209 = vmatprep.subr.bf16.mxu0 0
    %210 = vmatpush1.bf16.msra.mxu0 0
    %211 = vmatprep.subr.bf16.mxu0 0
    %212 = vmatpush1.bf16.msra.mxu0 0
    %213 = vmatprep.subr.bf16.mxu0 0
    %214 = vmatpush1.bf16.msra.mxu0 0
    %215 = vmatprep.subr.bf16.mxu0 0
    %216 = vmatpush1.bf16.msra.mxu0 0
    %217 = vmatprep.subr.bf16.mxu0 0
    %218 = vmatpush1.bf16.msra.mxu0 0
    %219 = vmatprep.mubr.bf16.mxu0 0
    %220 = vmatmul.mubr.bf16.gmra.mrb[0].mxu0 %v185
    %v221 = vpop.f32.mrb[0].mxu0
    %v222 = vadd.f32 %v157, %v221
    %v223 = vpop.f32.mrb[0].mxu0
    %v224 = vpop.f32.mrb[0].mxu0
    %v225 = vadd.f32 %v157, %v224
    %v226 = vpop.f32.mrb[0].mxu0
    %227 = vdwg.mxu0
    %v228 = vmax.f32 %v222, 0.0
    %v229 = vmax.f32 %v225, 0.0
    %v230 = vpack.c.bf16 %v229, %v228
    %v231 = vld [vmem:[%s5] sm:$0x1]
    %v232 = vld [vmem:[#allocation2] sm:$0x1]
    %v233 = vunpack.c.l.bf16 %v230
    %v234 = vunpack.c.h.bf16 %v230
    %v236 = vlaneseq
    %v237 = vshrl.u32 %v236, 7
    %v238 = vsub.s32 0, %v237
    %v239 = vrot.slane %v231, %v238
    %v241 = vmul.f32 %v233, %v239
    %v242 = vmul.f32 %v234, %v239
    %v243 = vsel %vm183, %v241, 0.0
    %244 = vadd.xlane.f32.xlu0 %v243
    %v245 = vpop.xlane.xlu0 %244
    %v246 = vsel %vm183, %v242, 0.0
    %247 = vadd.xlane.f32.xlu0 %v246
    %v248 = vpop.xlane.xlu0 %247
    %v250 = vlaneseq
    %v251 = vshrl.u32 %v250, 7
    %v252 = vsub.s32 0, %v251
    %v253 = vrot.slane %v232, %v252
    %v255 = vadd.f32 %v245, %v253
    %v256 = vadd.f32 %v248, %v253
    %vm257 = vcmask 7168
    %258 = vst.msk [vmem:[%s7] sm:$0xff] %vm257, %v255
    %259 = vst.msk [vmem:[%s7 + $0x8] sm:$0xff] %vm257, %v256
    // Predicated region
    $region42: #{tpu_custom_call.1} parent=1 // pred_check
      _
    $region43: #{tpu_custom_call.1} parent=1 // pred_check_branch
      %261 = sbr.rel (0) target = $region45
    $region44: #{tpu_custom_call.1} parent=1 // pred_region
      _
    $region45: #{tpu_custom_call.1} parent=1 // pred_fallthru
      _
    // Predicated region
    $region46: #{tpu_custom_call.1} parent=1 // pred_check
      _
    $region47: #{tpu_custom_call.1} parent=1 // pred_check_branch
      %263 = sbr.rel (0) target = $region49
    $region48: #{tpu_custom_call.1} parent=1 // pred_region
      _
    $region49: #{tpu_custom_call.1} parent=1 // pred_fallthru
      _
    %264 = vsyncpa [#allocation4], 1
    %265 = vsyncpa [#allocation6], 1

// kernel: tpu_custom_call.1
$region0: #{tpu_custom_call.1}
  #allocation0 [shape = 'u32[]', space=smem, size = 0x4, offset = 0x4, fixed_abs, tag = 'smem constant byte address 0x4 - core index']
  #allocation1 [shape = 'u32[144,128]{1,0:T(1,128)}', space=vmem, size = 0x12000, scoped, tag = 'internal scratch']
  #allocation2 [shape = 'f32[1,1]{1,0:T(1,128)S(1)}', space=vmem, size = 0x200, scoped, tag = 'scoped memory for tpu_custom_call.1']
  %s0 = inlined_call_operand.hbm [shape: f32[16,32], index: 0, kind: input, shape index: {}]
  %s1 = inlined_call_operand.hbm [shape: bf16[32,64], index: 1, kind: input, shape index: {}]
  %s2 = inlined_call_operand.vmem [shape: f32[1,64], index: 2, kind: input, shape index: {}]
  %s3 = inlined_call_operand.hbm [shape: bf16[64,64], index: 3, kind: input, shape index: {}]
  %s4 = inlined_call_operand.vmem [shape: f32[1,64], index: 4, kind: input, shape index: {}]
  %s5 = inlined_call_operand.vmem [shape: f32[1,64], index: 5, kind: input, shape index: {}]
  %s6 = inlined_call_operand.<no memory space> [shape: f32[1,1], index: 6, kind: input, shape index: {}]
  %s7 = inlined_call_operand.vmem [shape: f32[16,1], index: 7, kind: output, shape index: {}]
  %s8 = sld [smem:[#allocation0]]
  $region50: #{tpu_custom_call.1} parent=0
    _
  %s10 = ssub.s32 1, %s8
  %s11 = scalar_select 0, %s10, %s8
  %v12 = vstv %s6
  %13 = vst [vmem:[#allocation2] sm:$0x1] %v12
  $region1: #{tpu_custom_call.1} parent=0
    #allocation3 [shape = 'u8[8192]{0}', space=vmem, size = 0x2000, scoped, tag = 'input window, operand 0, single buffered']
    #allocation4 [shape = 's32[1]{0}', space=sflag, size = 0x4, scoped, tag = 'scoped memory for tpu_custom_call.1']
    #allocation5 [shape = 'u8[8192]{0}', space=vmem, size = 0x2000, scoped, tag = 'input window, operand 1, single buffered']
    #allocation6 [shape = 's32[1]{0}', space=sflag, size = 0x4, scoped, tag = 'scoped memory for tpu_custom_call.1']
    #allocation7 [shape = 'u8[16384]{0}', space=vmem, size = 0x4000, scoped, tag = 'input window, operand 3, single buffered']
    %14 = vsyncpa [#allocation4], 0
    %15 = vsyncpa [#allocation6], 0
    // Predicated region
    $region2: #{tpu_custom_call.1} parent=1 // pred_check
      _
    $region3: #{tpu_custom_call.1} parent=1 // pred_check_branch
      %17 = sbr.rel (0) target = $region5
    $region4: #{tpu_custom_call.1} parent=1 // pred_region
      %s19 = ssub.s32 256, 256
      %20 = vsyncadd [#allocation4], %s19
      %s21 = sshll.u32 [#allocation3], 4
      %s22 = int_to_ptr.vmem [resolvable:$true] %s21
      %27 = dma.hbm_to_vmem [thread:$0]  %s0, 256, %s22, [#allocation4], 128, 128, 8
    $region5: #{tpu_custom_call.1} parent=1 // pred_fallthru
      _
    // Predicated region
    $region6: #{tpu_custom_call.1} parent=1 // pred_check
      _
    $region7: #{tpu_custom_call.1} parent=1 // pred_check_branch
      %29 = sbr.rel (0) target = $region9
    $region8: #{tpu_custom_call.1} parent=1 // pred_region
      %s31 = ssub.s32 256, 256
      %32 = vsyncadd [#allocation6], %s31
      %s33 = sshll.u32 [#allocation5], 4
      %s34 = int_to_ptr.vmem [resolvable:$true] %s33
      %39 = dma.hbm_to_vmem [thread:$0]  %s1, 256, %s34, [#allocation6], 64, 64, 4
    $region9: #{tpu_custom_call.1} parent=1 // pred_fallthru
      _
    // Predicated region
    $region10: #{tpu_custom_call.1} parent=1 // pred_check
      _
    $region11: #{tpu_custom_call.1} parent=1 // pred_check_branch
      %41 = sbr.rel (0) target = $region13
    $region12: #{tpu_custom_call.1} parent=1 // pred_region
      _
    $region13: #{tpu_custom_call.1} parent=1 // pred_fallthru
      _
    // Predicated region
    $region14: #{tpu_custom_call.1} parent=1 // pred_check
      _
    $region15: #{tpu_custom_call.1} parent=1 // pred_check_branch
      %43 = sbr.rel (0) target = $region17
    $region16: #{tpu_custom_call.1} parent=1 // pred_region
      %s45 = ssub.s32 512, 512
      %46 = vsyncadd [#allocation6], %s45
      %s47 = sshll.u32 [#allocation7], 4
      %s48 = int_to_ptr.vmem [resolvable:$true] %s47
      %53 = dma.hbm_to_vmem [thread:$0]  %s3, 512, %s48, [#allocation6], 64, 64, 4
    $region17: #{tpu_custom_call.1} parent=1 // pred_fallthru
      _
    // Predicated region
    $region18: #{tpu_custom_call.1} parent=1 // pred_check
      _
    $region19: #{tpu_custom_call.1} parent=1 // pred_check_branch
      %55 = sbr.rel (0) target = $region21
    $region20: #{tpu_custom_call.1} parent=1 // pred_region
      _
    $region21: #{tpu_custom_call.1} parent=1 // pred_fallthru
      _
    // Predicated region
    $region22: #{tpu_custom_call.1} parent=1 // pred_check
      _
    $region23: #{tpu_custom_call.1} parent=1 // pred_check_branch
      %57 = sbr.rel (0) target = $region25
    $region24: #{tpu_custom_call.1} parent=1 // pred_region
      _
    $region25: #{tpu_custom_call.1} parent=1 // pred_fallthru
      _
    // Predicated region
    $region26: #{tpu_custom_call.1} parent=1 // pred_check
      _
    $region27: #{tpu_custom_call.1} parent=1 // pred_check_branch
      %59 = sbr.rel (0) target = $region29
    $region28: #{tpu_custom_call.1} parent=1 // pred_region
      _
    $region29: #{tpu_custom_call.1} parent=1 // pred_fallthru
      _
    // Predicated region
    $region30: #{tpu_custom_call.1} parent=1 // pred_check
      _
    $region31: #{tpu_custom_call.1} parent=1 // pred_check_branch
      %61 = sbr.rel (0) target = $region33
    $region32: #{tpu_custom_call.1} parent=1 // pred_region
      %62 = dma.done [#allocation4], 256
    $region33: #{tpu_custom_call.1} parent=1 // pred_fallthru
      _
    // Predicated region
    $region34: #{tpu_custom_call.1} parent=1 // pred_check
      _
    $region35: #{tpu_custom_call.1} parent=1 // pred_check_branch
      %64 = sbr.rel (0) target = $region37
    $region36: #{tpu_custom_call.1} parent=1 // pred_region
      %65 = dma.done [#allocation6], 256
    $region37: #{tpu_custom_call.1} parent=1 // pred_fallthru
      _
    // Predicated region
    $region38: #{tpu_custom_call.1} parent=1 // pred_check
      _
    $region39: #{tpu_custom_call.1} parent=1 // pred_check_branch
      %67 = sbr.rel (0) target = $region41
    $region40: #{tpu_custom_call.1} parent=1 // pred_region
      %68 = dma.done [#allocation6], 512
    $region41: #{tpu_custom_call.1} parent=1 // pred_fallthru
      _
    %v70 = vld [vmem:[#allocation3] sm:$0xff]
    %v71 = vld [vmem:[#allocation3 + $0x8] sm:$0xff]
    %v72 = vpack.c.bf16 %v71, %v70
    %v73 = vld [vmem:[#allocation5] sm:$0xf]
    %v74 = vld [vmem:[#allocation5 + $0x4] sm:$0xf]
    %v75 = vld [vmem:[#allocation5 + $0x8] sm:$0xf]
    %v76 = vld [vmem:[#allocation5 + $0xc] sm:$0xf]
    %v77 = vld [vmem:[%s2] sm:$0x1]
    %v79 = vlaneseq
    %v80 = vshrl.u32 %v79, 7
    %v81 = vsub.s32 0, %v80
    %v82 = vrot.slane %v77, %v81
    %v88 = vunpack.c.l.b16 %v73
    %v89 = vunpack.c.l.b16 %v74
    %v90 = vunpack.c.l.b16 %v75
    %v91 = vunpack.c.l.b16 %v76
    %v92 = vpack.c.b16 %v89, %v88
    %v93 = vpack.c.b16 %v91, %v90
    %vm96 = vcmask 261120
    %v98 = vsel %vm96, %v72, 0
    %100 = vmatprep.subr.bf16.mxu0 0
    %101 = vmatpush1.bf16.msra.mxu0 %v92
    %102 = vmatprep.subr.bf16.mxu0 0
    %103 = vmatpush1.bf16.msra.mxu0 %v93
    %104 = vmatprep.subr.bf16.mxu0 0
    %105 = vmatpush1.bf16.msra.mxu0 0
    %106 = vmatprep.subr.bf16.mxu0 0
    %107 = vmatpush1.bf16.msra.mxu0 0
    %108 = vmatprep.subr.bf16.mxu0 0
    %109 = vmatpush1.bf16.msra.mxu0 0
    %110 = vmatprep.subr.bf16.mxu0 0
    %111 = vmatpush1.bf16.msra.mxu0 0
    %112 = vmatprep.subr.bf16.mxu0 0
    %113 = vmatpush1.bf16.msra.mxu0 0
    %114 = vmatprep.subr.bf16.mxu0 0
    %115 = vmatpush1.bf16.msra.mxu0 0
    %116 = vmatprep.subr.bf16.mxu0 0
    %117 = vmatpush1.bf16.msra.mxu0 0
    %118 = vmatprep.subr.bf16.mxu0 0
    %119 = vmatpush1.bf16.msra.mxu0 0
    %120 = vmatprep.subr.bf16.mxu0 0
    %121 = vmatpush1.bf16.msra.mxu0 0
    %122 = vmatprep.subr.bf16.mxu0 0
    %123 = vmatpush1.bf16.msra.mxu0 0
    %124 = vmatprep.subr.bf16.mxu0 0
    %125 = vmatpush1.bf16.msra.mxu0 0
    %126 = vmatprep.subr.bf16.mxu0 0
    %127 = vmatpush1.bf16.msra.mxu0 0
    %128 = vmatprep.subr.bf16.mxu0 0
    %129 = vmatpush1.bf16.msra.mxu0 0
    %130 = vmatprep.subr.bf16.mxu0 0
    %131 = vmatpush1.bf16.msra.mxu0 0
    %132 = vmatprep.mubr.bf16.mxu0 0
    %133 = vmatmul.mubr.bf16.gmra.mrb[0].mxu0 %v98
    %v134 = vpop.f32.mrb[0].mxu0
    %v135 = vadd.f32 %v82, %v134
    %v136 = vpop.f32.mrb[0].mxu0
    %v137 = vpop.f32.mrb[0].mxu0
    %v138 = vadd.f32 %v82, %v137
    %v139 = vpop.f32.mrb[0].mxu0
    %140 = vdwg.mxu0
    %v141 = vmax.f32 %v135, 0.0
    %v142 = vmax.f32 %v138, 0.0
    %v143 = vpack.c.bf16 %v142, %v141
    %v144 = vld [vmem:[#allocation7] sm:$0xf]
    %v145 = vld [vmem:[#allocation7 + $0x4] sm:$0xf]
    %v146 = vld [vmem:[#allocation7 + $0x8] sm:$0xf]
    %v147 = vld [vmem:[#allocation7 + $0xc] sm:$0xf]
    %v148 = vld [vmem:[#allocation7 + $0x10] sm:$0xf]
    %v149 = vld [vmem:[#allocation7 + $0x14] sm:$0xf]
    %v150 = vld [vmem:[#allocation7 + $0x18] sm:$0xf]
    %v151 = vld [vmem:[#allocation7 + $0x1c] sm:$0xf]
    %v152 = vld [vmem:[%s4] sm:$0x1]
    %v154 = vlaneseq
    %v155 = vshrl.u32 %v154, 7
    %v156 = vsub.s32 0, %v155
    %v157 = vrot.slane %v152, %v156
    %v167 = vunpack.c.l.b16 %v144
    %v168 = vunpack.c.l.b16 %v145
    %v169 = vunpack.c.l.b16 %v146
    %v170 = vunpack.c.l.b16 %v147
    %v171 = vunpack.c.l.b16 %v148
    %v172 = vunpack.c.l.b16 %v149
    %v173 = vunpack.c.l.b16 %v150
    %v174 = vunpack.c.l.b16 %v151
    %v175 = vpack.c.b16 %v168, %v167
    %v176 = vpack.c.b16 %v170, %v169
    %v177 = vpack.c.b16 %v172, %v171
    %v178 = vpack.c.b16 %v174, %v173
    %vm183 = vcmask 523264
    %v185 = vsel %vm183, %v143, 0
    %187 = vmatprep.subr.bf16.mxu0 0
    %188 = vmatpush1.bf16.msra.mxu0 %v175
    %189 = vmatprep.subr.bf16.mxu0 0
    %190 = vmatpush1.bf16.msra.mxu0 %v176
    %191 = vmatprep.subr.bf16.mxu0 0
    %192 = vmatpush1.bf16.msra.mxu0 %v177
    %193 = vmatprep.subr.bf16.mxu0 0
    %194 = vmatpush1.bf16.msra.mxu0 %v178
    %195 = vmatprep.subr.bf16.mxu0 0
    %196 = vmatpush1.bf16.msra.mxu0 0
    %197 = vmatprep.subr.bf16.mxu0 0
    %198 = vmatpush1.bf16.msra.mxu0 0
    %199 = vmatprep.subr.bf16.mxu0 0
    %200 = vmatpush1.bf16.msra.mxu0 0
    %201 = vmatprep.subr.bf16.mxu0 0
    %202 = vmatpush1.bf16.msra.mxu0 0
    %203 = vmatprep.subr.bf16.mxu0 0
    %204 = vmatpush1.bf16.msra.mxu0 0
    %205 = vmatprep.subr.bf16.mxu0 0
    %206 = vmatpush1.bf16.msra.mxu0 0
    %207 = vmatprep.subr.bf16.mxu0 0
    %208 = vmatpush1.bf16.msra.mxu0 0
    %209 = vmatprep.subr.bf16.mxu0 0
    %210 = vmatpush1.bf16.msra.mxu0 0
    %211 = vmatprep.subr.bf16.mxu0 0
    %212 = vmatpush1.bf16.msra.mxu0 0
    %213 = vmatprep.subr.bf16.mxu0 0
    %214 = vmatpush1.bf16.msra.mxu0 0
    %215 = vmatprep.subr.bf16.mxu0 0
    %216 = vmatpush1.bf16.msra.mxu0 0
    %217 = vmatprep.subr.bf16.mxu0 0
    %218 = vmatpush1.bf16.msra.mxu0 0
    %219 = vmatprep.mubr.bf16.mxu0 0
    %220 = vmatmul.mubr.bf16.gmra.mrb[0].mxu0 %v185
    %v221 = vpop.f32.mrb[0].mxu0
    %v222 = vadd.f32 %v157, %v221
    %v223 = vpop.f32.mrb[0].mxu0
    %v224 = vpop.f32.mrb[0].mxu0
    %v225 = vadd.f32 %v157, %v224
    %v226 = vpop.f32.mrb[0].mxu0
    %227 = vdwg.mxu0
    %v228 = vmax.f32 %v222, 0.0
    %v229 = vmax.f32 %v225, 0.0
    %v230 = vpack.c.bf16 %v229, %v228
    %v231 = vld [vmem:[%s5] sm:$0x1]
    %v232 = vld [vmem:[#allocation2] sm:$0x1]
    %v233 = vunpack.c.l.bf16 %v230
    %v234 = vunpack.c.h.bf16 %v230
    %v236 = vlaneseq
    %v237 = vshrl.u32 %v236, 7
    %v238 = vsub.s32 0, %v237
    %v239 = vrot.slane %v231, %v238
    %v241 = vmul.f32 %v233, %v239
    %v242 = vmul.f32 %v234, %v239
    %v243 = vsel %vm183, %v241, 0.0
    %244 = vadd.xlane.f32.xlu0 %v243
    %v245 = vpop.xlane.xlu0 %244
    %v246 = vsel %vm183, %v242, 0.0
    %247 = vadd.xlane.f32.xlu0 %v246
    %v248 = vpop.xlane.xlu0 %247
    %v250 = vlaneseq
    %v251 = vshrl.u32 %v250, 7
    %v252 = vsub.s32 0, %v251
    %v253 = vrot.slane %v232, %v252
    %v255 = vadd.f32 %v245, %v253
    %v256 = vadd.f32 %v248, %v253
    %vm257 = vcmask 7168
    %258 = vst.msk [vmem:[%s7] sm:$0xff] %vm257, %v255
    %259 = vst.msk [vmem:[%s7 + $0x8] sm:$0xff] %vm257, %v256
    // Predicated region
    $region42: #{tpu_custom_call.1} parent=1 // pred_check
      _
    $region43: #{tpu_custom_call.1} parent=1 // pred_check_branch
      %261 = sbr.rel (0) target = $region45
    $region44: #{tpu_custom_call.1} parent=1 // pred_region
      _
    $region45: #{tpu_custom_call.1} parent=1 // pred_fallthru
      _
    // Predicated region
    $region46: #{tpu_custom_call.1} parent=1 // pred_check
      _
    $region47: #{tpu_custom_call.1} parent=1 // pred_check_branch
      %263 = sbr.rel (0) target = $region49
    $region48: #{tpu_custom_call.1} parent=1 // pred_region
      _
    $region49: #{tpu_custom_call.1} parent=1 // pred_fallthru
      _
    %264 = vsyncpa [#allocation4], 1
    %265 = vsyncpa [#allocation6], 1

</llo_original>
